<compile_context>
chip_gen: v7x
topology: tpu7x:2x2x1
jax: 0.10.0
libtpu: 0.0.40
codegen_flags: <defaults>
</compile_context>

<pallas_src>
import functools

import jax
import jax.numpy as jnp
from jax import lax
from jax.experimental import pallas as pl
from jax.experimental.pallas import tpu as pltpu


def _counts_kernel(pre_ref, gt_ref, tp_ref, sp_ref, sg_ref,
                   *, n_rows, steps, block_n, needs_mask):
    """Accumulate TP (Cp,Cg), s_pre (8,Cp), s_gt (8,Cg) for one N-split."""
    s = pl.program_id(0)          # parallel split (one per TensorCore on v7x)
    k = pl.program_id(1)          # reduction step within the split

    @pl.when(k == 0)
    def _():
        tp_ref[...] = jnp.zeros_like(tp_ref)
        sp_ref[...] = jnp.zeros_like(sp_ref)
        sg_ref[...] = jnp.zeros_like(sg_ref)

    pre = pre_ref[...]            # (block_n, Cp) float32
    gt = gt_ref[...]              # (block_n, Cg) float32

    if needs_mask:
        # Zero rows whose *logical* index is past the true row count.  Covers
        # both the ragged last block (garbage tail) and fully-out-of-range
        # blocks whose index_map was clamped.
        row0 = (s * steps + k) * block_n
        rows = row0 + lax.broadcasted_iota(jnp.int32, (block_n, 1), 0)
        keep = rows < n_rows
        pre = jnp.where(keep, pre, 0.0)
        gt = jnp.where(keep, gt, 0.0)

    # TP += pre^T @ gt : contract the sample axis of both operands, f32 MXU
    # accumulation (same contraction as the previous, verified version).
    dn_tt = (((0,), (0,)), ((), ()))
    tp_ref[...] += lax.dot_general(pre, gt, dn_tt,
                                   preferred_element_type=jnp.float32)

    # Column sums on the MXU: ones(8, block_n) @ x -> every one of the 8
    # output rows equals the per-step column sum.  Accumulating the full
    # (8, C) tile keeps stores unmasked and avoids an XLU reduce; row 0 is
    # read back in the wrapper epilogue.
    ones = jnp.ones((8, block_n), jnp.float32)
    dn_std = (((1,), (0,)), ((), ()))
    sp_ref[...] += lax.dot_general(ones, pre, dn_std,
                                   preferred_element_type=jnp.float32)
    sg_ref[...] += lax.dot_general(ones, gt, dn_std,
                                   preferred_element_type=jnp.float32)


def _choose_block_n(n_rows, c_total, block_n):
    if block_n is None:
        # ~16 MiB of double-buffered f32 input tiles, capped at 4096 rows.
        budget = 16 * 1024 * 1024
        cap = budget // (2 * 4 * max(c_total, 1))
        cap = max(8, min(4096, cap))
    else:
        cap = max(1, int(block_n))
    if n_rows <= cap:
        return n_rows                   # single block == full array dim (legal)
    return max(8, (cap // 8) * 8)       # 8-row (f32 sublane) aligned tile


def prf1_metrics(pre, gt, *, block_n=None, n_split=None):
    """Pallas equivalent of PRF1_Metrics.forward(pre, gt).

    pre: [N, Cp], gt: [N, Cg].  Returns dict of [Cp, Cg] float32 arrays.
    """
    assert pre.ndim == 2 and gt.ndim == 2
    assert pre.shape[0] == gt.shape[0]
    n_rows, cp = pre.shape
    _, cg = gt.shape

    pre = pre.astype(jnp.float32)
    gt = gt.astype(jnp.float32)

    block_n = _choose_block_n(n_rows, cp + cg, block_n)
    num_blocks = pl.cdiv(n_rows, block_n)
    if n_split is None:
        n_split = 2 if num_blocks >= 2 else 1   # v7x: one split per TensorCore
    n_split = max(1, min(int(n_split), num_blocks))
    steps = pl.cdiv(num_blocks, n_split)
    needs_mask = (n_split * steps * block_n) != n_rows
    need_clamp = (n_split * steps) != num_blocks

    def in_map(s, k):
        idx = s * steps + k
        if need_clamp:
            idx = jnp.minimum(idx, num_blocks - 1)
        return (idx, 0)

    out_shapes = (
        jax.ShapeDtypeStruct((n_split, cp, cg), jnp.float32),   # TP partials
        jax.ShapeDtypeStruct((n_split, 8, cp), jnp.float32),    # s_pre partials
        jax.ShapeDtypeStruct((n_split, 8, cg), jnp.float32),    # s_gt partials
    )
    out_specs = [
        pl.BlockSpec((None, cp, cg), lambda s, k: (s, 0, 0)),
        pl.BlockSpec((None, 8, cp), lambda s, k: (s, 0, 0)),
        pl.BlockSpec((None, 8, cg), lambda s, k: (s, 0, 0)),
    ]

    # VMEM: double-buffered input tiles + (double-buffered) resident outputs
    # + the ones(8, block_n) constant + margin.
    need_bytes = (2 * 2 * block_n * (cp + cg) * 4
                  + 2 * (cp * cg + 8 * cp + 8 * cg) * 4
                  + 8 * block_n * 4
                  + (2 << 20))
    try:
        vmem_cap = int(0.75 * pltpu.get_tpu_info().vmem_capacity_bytes)
    except Exception:
        vmem_cap = 48 * 1024 * 1024                 # safe on v5e / v6e / v7x
    vmem_limit = int(min(max(need_bytes, 16 * 1024 * 1024), vmem_cap))

    kernel = functools.partial(
        _counts_kernel, n_rows=int(n_rows), steps=int(steps),
        block_n=int(block_n), needs_mask=bool(needs_mask))

    tp_parts, sp_parts, sg_parts = pl.pallas_call(
        kernel,
        out_shape=out_shapes,
        grid_spec=pltpu.PrefetchScalarGridSpec(
            num_scalar_prefetch=0,
            grid=(n_split, steps),
            in_specs=[
                pl.BlockSpec((block_n, cp), in_map),
                pl.BlockSpec((block_n, cg), in_map),
            ],
            out_specs=out_specs,
        ),
        compiler_params=pltpu.CompilerParams(
            dimension_semantics=("parallel", "arbitrary"),
            vmem_limit_bytes=vmem_limit,
        ),
    )(pre, gt)

    # Tiny wrapper epilogue (reviewer-suggested): combine per-split partial
    # counts and evaluate the metrics on the small (Cp, Cg) confusion matrix.
    tp = tp_parts.sum(axis=0)                       # (Cp, Cg)
    s_pre = sp_parts[:, 0, :].sum(axis=0)           # (Cp,)
    s_gt = sg_parts[:, 0, :].sum(axis=0)            # (Cg,)

    n = jnp.float32(n_rows)
    fp = s_pre[:, None] - tp
    fn = s_gt[None, :] - tp
    tn = n - s_pre[:, None] - s_gt[None, :] + tp

    eps = jnp.float32(1e-8)
    accuracy = (tp + tn) / (tp + tn + fn + fp + eps)
    precision = tp / (fp + tp + eps)
    recall = tp / (fn + tp + eps)
    f1 = 2.0 * precision * recall / (precision + recall + eps)
    return {"accuracy": accuracy, "precision": precision,
            "recall": recall, "F1": f1}


def _reference(pre, gt):
    # Pure-JAX reference reproducing the torch module exactly.
    pre = pre.astype(jnp.float32)
    gt = gt.astype(jnp.float32)
    tn = (1.0 - pre).T @ (1.0 - gt)
    fn = (1.0 - pre).T @ gt
    fp = pre.T @ (1.0 - gt)
    tp = pre.T @ gt
    acc = (tp + tn) / (tp + tn + fn + fp + 1e-8)
    precision = tp / (fp + tp + 1e-8)
    recall = tp / (fn + tp + 1e-8)
    f1 = 2.0 * precision * recall / (precision + recall + 1e-8)
    return {"accuracy": acc, "precision": precision,
            "recall": recall, "F1": f1}


if __name__ == "__main__":
    key = jax.random.PRNGKey(0)
    k1, k2, k3, k4 = jax.random.split(key, 4)

    # Case 1: small, single grid step (N=16 samples, 8 classes).
    n1, c1 = 16, 8
    pre1 = jax.random.bernoulli(k1, p=0.5, shape=(n1, c1)).astype(jnp.float32)
    gt1 = jax.random.bernoulli(k2, p=0.5, shape=(n1, c1)).astype(jnp.float32)
    out1 = prf1_metrics(pre1, gt1)
    jax.block_until_ready(out1)

    # Case 2: ragged N (300 rows, block_n=128), multi-step reduction, 2-way
    # parallel split, asymmetric class counts -> exercises the in-kernel row
    # mask and the clamped index_map path.
    n2, cp2, cg2 = 300, 10, 6
    pre2 = jax.random.bernoulli(k3, p=0.4, shape=(n2, cp2)).astype(jnp.float32)
    gt2 = jax.random.bernoulli(k4, p=0.6, shape=(n2, cg2)).astype(jnp.float32)
    out2 = prf1_metrics(pre2, gt2, block_n=128)
    jax.block_until_ready(out2)

    for out, ref in ((out1, _reference(pre1, gt1)),
                     (out2, _reference(pre2, gt2))):
        for name in ("accuracy", "precision", "recall", "F1"):
            assert jnp.allclose(out[name], ref[name],
                                atol=1e-5, rtol=1e-5), name

    print("KERNEL_OK")
</pallas_src>

<mosaic_0001>
module attributes {stable_mosaic.version = 11 : i64} {
  func.func @_counts_kernel(%arg0: i32, %arg1: i32, %arg2: memref<16x8xf32, #tpu.memory_space<vmem>>, %arg3: memref<16x8xf32, #tpu.memory_space<vmem>>, %arg4: memref<1x8x8xf32, #tpu.memory_space<vmem>>, %arg5: memref<1x8x8xf32, #tpu.memory_space<vmem>>, %arg6: memref<1x8x8xf32, #tpu.memory_space<vmem>>) attributes {dimension_semantics = [#tpu.dimension_semantics<parallel>, #tpu.dimension_semantics<arbitrary>], iteration_bounds = array<i64: 1, 1>, scalar_prefetch = 0 : i64, scratch_operands = 0 : i64, tpu.core_type = #tpu.core_type<tc>, window_params = [{transform_indices = @transform_0, window_bounds = array<i64: 16, 8>}, {transform_indices = @transform_1, window_bounds = array<i64: 16, 8>}, {transform_indices = @transform_2, window_bounds = array<i64: 1, 8, 8>}, {transform_indices = @transform_3, window_bounds = array<i64: 1, 8, 8>}, {transform_indices = @transform_4, window_bounds = array<i64: 1, 8, 8>}]} {
    %c0_i32 = arith.constant 0 : i32
    %0 = arith.cmpi eq, %arg1, %c0_i32 : i32
    %1 = arith.extui %0 : i1 to i32
    %c0_i32_0 = arith.constant 0 : i32
    %2 = arith.cmpi ne, %1, %c0_i32_0 : i32
    scf.if %2 {
      %cst_25 = arith.constant 0.000000e+00 : f32
      %27 = vector.broadcast %cst_25 : f32 to vector<8x8xf32>
      %c0_26 = arith.constant 0 : index
      %c0_27 = arith.constant 0 : index
      %c0_28 = arith.constant 0 : index
      %28 = vector.load %arg4[%c0_26, %c0_27, %c0_28] : memref<1x8x8xf32, #tpu.memory_space<vmem>>, vector<1x8x8xf32>
      %29 = vector.shape_cast %28 : vector<1x8x8xf32> to vector<8x8xf32>
      %30 = vector.shape_cast %27 : vector<8x8xf32> to vector<1x8x8xf32>
      tpu.vector_store %arg4[%c0_26, %c0_27, %c0_28], %30 {strides = array<i32>} : memref<1x8x8xf32, #tpu.memory_space<vmem>>, vector<1x8x8xf32>,
      %cst_29 = arith.constant 0.000000e+00 : f32
      %31 = vector.broadcast %cst_29 : f32 to vector<8x8xf32>
      %c0_30 = arith.constant 0 : index
      %c0_31 = arith.constant 0 : index
      %c0_32 = arith.constant 0 : index
      %32 = vector.load %arg5[%c0_30, %c0_31, %c0_32] : memref<1x8x8xf32, #tpu.memory_space<vmem>>, vector<1x8x8xf32>
      %33 = vector.shape_cast %32 : vector<1x8x8xf32> to vector<8x8xf32>
      %34 = vector.shape_cast %31 : vector<8x8xf32> to vector<1x8x8xf32>
      tpu.vector_store %arg5[%c0_30, %c0_31, %c0_32], %34 {strides = array<i32>} : memref<1x8x8xf32, #tpu.memory_space<vmem>>, vector<1x8x8xf32>,
      %cst_33 = arith.constant 0.000000e+00 : f32
      %35 = vector.broadcast %cst_33 : f32 to vector<8x8xf32>
      %c0_34 = arith.constant 0 : index
      %c0_35 = arith.constant 0 : index
      %c0_36 = arith.constant 0 : index
      %36 = vector.load %arg6[%c0_34, %c0_35, %c0_36] : memref<1x8x8xf32, #tpu.memory_space<vmem>>, vector<1x8x8xf32>
      %37 = vector.shape_cast %36 : vector<1x8x8xf32> to vector<8x8xf32>
      %38 = vector.shape_cast %35 : vector<8x8xf32> to vector<1x8x8xf32>
      tpu.vector_store %arg6[%c0_34, %c0_35, %c0_36], %38 {strides = array<i32>} : memref<1x8x8xf32, #tpu.memory_space<vmem>>, vector<1x8x8xf32>,
    } else {
    }
    %c0 = arith.constant 0 : index
    %c0_1 = arith.constant 0 : index
    %3 = vector.load %arg2[%c0, %c0_1] : memref<16x8xf32, #tpu.memory_space<vmem>>, vector<16x8xf32>
    %c0_2 = arith.constant 0 : index
    %c0_3 = arith.constant 0 : index
    %4 = vector.load %arg3[%c0_2, %c0_3] : memref<16x8xf32, #tpu.memory_space<vmem>>, vector<16x8xf32>
    %c0_4 = arith.constant 0 : index
    %c0_5 = arith.constant 0 : index
    %c0_6 = arith.constant 0 : index
    %5 = vector.load %arg4[%c0_4, %c0_5, %c0_6] : memref<1x8x8xf32, #tpu.memory_space<vmem>>, vector<1x8x8xf32>
    %6 = vector.shape_cast %5 : vector<1x8x8xf32> to vector<8x8xf32>
    %cst = arith.constant dense<0.000000e+00> : vector<8x8xf32>
    %7 = tpu.matmul %3, %4, %cst {dimension_numbers = #tpu.dot_dimension_numbers<[0], [0], [1], [1], [0, 1, 1, 1], [], []>} : vector<16x8xf32>, vector<16x8xf32>, vector<8x8xf32> -> vector<8x8xf32>
    %8 = arith.addf %6, %7 : vector<8x8xf32>
    %c0_7 = arith.constant 0 : index
    %c0_8 = arith.constant 0 : index
    %c0_9 = arith.constant 0 : index
    %9 = vector.load %arg4[%c0_7, %c0_8, %c0_9] : memref<1x8x8xf32, #tpu.memory_space<vmem>>, vector<1x8x8xf32>
    %10 = vector.shape_cast %9 : vector<1x8x8xf32> to vector<8x8xf32>
    %11 = vector.shape_cast %8 : vector<8x8xf32> to vector<1x8x8xf32>
    tpu.vector_store %arg4[%c0_7, %c0_8, %c0_9], %11 {strides = array<i32>} : memref<1x8x8xf32, #tpu.memory_space<vmem>>, vector<1x8x8xf32>,
    %cst_10 = arith.constant 1.000000e+00 : f32
    %12 = vector.broadcast %cst_10 : f32 to vector<8x16xf32>
    %c0_11 = arith.constant 0 : index
    %c0_12 = arith.constant 0 : index
    %c0_13 = arith.constant 0 : index
    %13 = vector.load %arg5[%c0_11, %c0_12, %c0_13] : memref<1x8x8xf32, #tpu.memory_space<vmem>>, vector<1x8x8xf32>
    %14 = vector.shape_cast %13 : vector<1x8x8xf32> to vector<8x8xf32>
    %cst_14 = arith.constant dense<0.000000e+00> : vector<8x8xf32>
    %15 = tpu.matmul %12, %3, %cst_14 {dimension_numbers = #tpu.dot_dimension_numbers<[1], [0], [0], [1], [0, 0, 1, 1], [], []>} : vector<8x16xf32>, vector<16x8xf32>, vector<8x8xf32> -> vector<8x8xf32>
    %16 = arith.addf %14, %15 : vector<8x8xf32>
    %c0_15 = arith.constant 0 : index
    %c0_16 = arith.constant 0 : index
    %c0_17 = arith.constant 0 : index
    %17 = vector.load %arg5[%c0_15, %c0_16, %c0_17] : memref<1x8x8xf32, #tpu.memory_space<vmem>>, vector<1x8x8xf32>
    %18 = vector.shape_cast %17 : vector<1x8x8xf32> to vector<8x8xf32>
    %19 = vector.shape_cast %16 : vector<8x8xf32> to vector<1x8x8xf32>
    tpu.vector_store %arg5[%c0_15, %c0_16, %c0_17], %19 {strides = array<i32>} : memref<1x8x8xf32, #tpu.memory_space<vmem>>, vector<1x8x8xf32>,
    %c0_18 = arith.constant 0 : index
    %c0_19 = arith.constant 0 : index
    %c0_20 = arith.constant 0 : index
    %20 = vector.load %arg6[%c0_18, %c0_19, %c0_20] : memref<1x8x8xf32, #tpu.memory_space<vmem>>, vector<1x8x8xf32>
    %21 = vector.shape_cast %20 : vector<1x8x8xf32> to vector<8x8xf32>
    %cst_21 = arith.constant dense<0.000000e+00> : vector<8x8xf32>
    %22 = tpu.matmul %12, %4, %cst_21 {dimension_numbers = #tpu.dot_dimension_numbers<[1], [0], [0], [1], [0, 0, 1, 1], [], []>} : vector<8x16xf32>, vector<16x8xf32>, vector<8x8xf32> -> vector<8x8xf32>
    %23 = arith.addf %21, %22 : vector<8x8xf32>
    %c0_22 = arith.constant 0 : index
    %c0_23 = arith.constant 0 : index
    %c0_24 = arith.constant 0 : index
    %24 = vector.load %arg6[%c0_22, %c0_23, %c0_24] : memref<1x8x8xf32, #tpu.memory_space<vmem>>, vector<1x8x8xf32>
    %25 = vector.shape_cast %24 : vector<1x8x8xf32> to vector<8x8xf32>
    %26 = vector.shape_cast %23 : vector<8x8xf32> to vector<1x8x8xf32>
    tpu.vector_store %arg6[%c0_22, %c0_23, %c0_24], %26 {strides = array<i32>} : memref<1x8x8xf32, #tpu.memory_space<vmem>>, vector<1x8x8xf32>,
    return
  }
  func.func @transform_0(%arg0: i32, %arg1: i32) -> (i32, i32) {
    %c1_i32 = arith.constant 1 : i32
    %0 = arith.muli %arg0, %c1_i32 : i32
    %1 = arith.addi %0, %arg1 : i32
    %c0_i32 = arith.constant 0 : i32
    %c0_i32_0 = arith.constant 0 : i32
    return %1, %c0_i32 : i32, i32
  }
  func.func @transform_1(%arg0: i32, %arg1: i32) -> (i32, i32) {
    %c1_i32 = arith.constant 1 : i32
    %0 = arith.muli %arg0, %c1_i32 : i32
    %1 = arith.addi %0, %arg1 : i32
    %c0_i32 = arith.constant 0 : i32
    %c0_i32_0 = arith.constant 0 : i32
    return %1, %c0_i32 : i32, i32
  }
  func.func @transform_2(%arg0: i32, %arg1: i32) -> (i32, i32, i32) {
    %c0_i32 = arith.constant 0 : i32
    %c0_i32_0 = arith.constant 0 : i32
    %c0_i32_1 = arith.constant 0 : i32
    return %arg0, %c0_i32, %c0_i32_0 : i32, i32, i32
  }
  func.func @transform_3(%arg0: i32, %arg1: i32) -> (i32, i32, i32) {
    %c0_i32 = arith.constant 0 : i32
    %c0_i32_0 = arith.constant 0 : i32
    %c0_i32_1 = arith.constant 0 : i32
    return %arg0, %c0_i32, %c0_i32_0 : i32, i32, i32
  }
  func.func @transform_4(%arg0: i32, %arg1: i32) -> (i32, i32, i32) {
    %c0_i32 = arith.constant 0 : i32
    %c0_i32_0 = arith.constant 0 : i32
    %c0_i32_1 = arith.constant 0 : i32
    return %arg0, %c0_i32, %c0_i32_0 : i32, i32, i32
  }
}

</mosaic_0001>

<llo_original>
// kernel: tpu_custom_call.1
$region0: #{tpu_custom_call.1}
  #allocation0 [shape = 'u32[]', space=smem, size = 0x4, offset = 0x4, fixed_abs, tag = 'smem constant byte address 0x4 - core index']
  #allocation1 [shape = 'u32[144,128]{1,0:T(1,128)}', space=vmem, size = 0x12000, scoped, tag = 'internal scratch']
  %s0 = inlined_call_operand.vmem [shape: f32[16,8], index: 0, kind: input, shape index: {}]
  %s1 = inlined_call_operand.vmem [shape: f32[16,8], index: 1, kind: input, shape index: {}]
  %s2 = inlined_call_operand.hbm [shape: f32[1,8,8], index: 2, kind: output, shape index: {0}]
  %s3 = inlined_call_operand.hbm [shape: f32[1,8,8], index: 3, kind: output, shape index: {1}]
  %s4 = inlined_call_operand.hbm [shape: f32[1,8,8], index: 4, kind: output, shape index: {2}]
  %5 = xla_tuple %s2, %s3, %s4
  %s6 = sld [smem:[#allocation0]]
  $region38: #{tpu_custom_call.1} parent=0
    _
  %s8 = ssub.s32 1, %s6
  %s9 = scalar_select 0, %s8, %s6
  $region1: #{tpu_custom_call.1} parent=0
    #allocation2 [shape = 'u8[4096]{0}', space=vmem, size = 0x1000, scoped, tag = 'output window, operand 0, single buffered']
    #allocation3 [shape = 's32[1]{0}', space=sflag, size = 0x4, scoped, tag = 'scoped memory for tpu_custom_call.1']
    #allocation4 [shape = 'u8[4096]{0}', space=vmem, size = 0x1000, scoped, tag = 'output window, operand 1, single buffered']
    #allocation5 [shape = 's32[1]{0}', space=sflag, size = 0x4, scoped, tag = 'scoped memory for tpu_custom_call.1']
    #allocation6 [shape = 'u8[4096]{0}', space=vmem, size = 0x1000, scoped, tag = 'output window, operand 2, single buffered']
    %10 = vsyncpa [#allocation3], 0
    %11 = vsyncpa [#allocation5], 0
    // Predicated region
    $region2: #{tpu_custom_call.1} parent=1 // pred_check
      _
    $region3: #{tpu_custom_call.1} parent=1 // pred_check_branch
      %13 = sbr.rel (0) target = $region5
    $region4: #{tpu_custom_call.1} parent=1 // pred_region
      %s14 = sadd.s32 0, 0
      %s15 = smul.u32 2, %s14
      %p16 = scmp.lt.s32.totalorder %s15, 1
      %s17 = scalar_select %p16, %s15, 1
      %s18 = smul.addr %s17, 8
      %s19 = scalar_lea.vmem %s0, %s18
      %s20 = sadd.s32 0, 0
      %s21 = smul.u32 2, %s20
    $region5: #{tpu_custom_call.1} parent=1 // pred_fallthru
      _
    // Predicated region
    $region6: #{tpu_custom_call.1} parent=1 // pred_check
      _
    $region7: #{tpu_custom_call.1} parent=1 // pred_check_branch
      %23 = sbr.rel (0) target = $region9
    $region8: #{tpu_custom_call.1} parent=1 // pred_region
      %s24 = sadd.s32 0, 0
      %s25 = smul.u32 2, %s24
      %p26 = scmp.lt.s32.totalorder %s25, 1
      %s27 = scalar_select %p26, %s25, 1
      %s28 = smul.addr %s27, 8
      %s29 = scalar_lea.vmem %s1, %s28
      %s30 = sadd.s32 0, 0
      %s31 = smul.u32 2, %s30
    $region9: #{tpu_custom_call.1} parent=1 // pred_fallthru
      _
    %s32 = sadd.s32 0, 0
    %s33 = smul.u32 2, %s32
    %p34 = scmp.lt.s32.totalorder %s33, 1
    %s35 = scalar_select %p34, %s33, 1
    %s36 = smul.addr %s35, 8
    %s37 = scalar_lea.vmem %s0, %s36
    %s38 = sadd.s32 0, 0
    %s39 = smul.u32 2, %s38
    %p40 = scmp.lt.s32.totalorder %s39, 1
    %s41 = scalar_select %p40, %s39, 1
    %s42 = smul.addr %s41, 8
    %s43 = scalar_lea.vmem %s1, %s42
    %s44 = sadd.s32 0, 0
    %s45 = smul.u32 2, %s44
    %p46 = scmp.lt.s32.totalorder %s45, 1
    %s47 = scalar_select %p46, %s45, 1
    %s48 = smul.addr %s47, 8
    %s49 = scalar_lea.vmem %s0, %s48
    %s50 = sadd.s32 0, 0
    %s51 = smul.u32 2, %s50
    %s52 = sadd.s32 0, 0
    %s53 = smul.u32 2, %s52
    %p54 = scmp.lt.s32.totalorder %s53, 1
    %s55 = scalar_select %p54, %s53, 1
    %s56 = smul.addr %s55, 8
    %s57 = scalar_lea.vmem %s1, %s56
    %s58 = sadd.s32 0, 0
    %s59 = smul.u32 2, %s58
    %p60 = scmp.eq.s32.totalorder 0, 0
    // Predicated region
    $region10: #{tpu_custom_call.1} parent=1 // pred_check
      %p61 = pneg %p60
    $region11: #{tpu_custom_call.1} parent=1 // pred_check_branch
      %63 = sbr.rel (%p61) target = $region13
    $region12: #{tpu_custom_call.1} parent=1 // pred_region
      %vm64 = vcmask 64512
      %65 = vst.msk [vmem:[#allocation2] sm:$0xff] %vm64, 0.0
      %66 = vst.msk [vmem:[#allocation4] sm:$0xff] %vm64, 0.0
      %67 = vst.msk [vmem:[#allocation6] sm:$0xff] %vm64, 0.0
    $region13: #{tpu_custom_call.1} parent=1 // pred_fallthru
      _
    %v68 = vld [vmem:[%s49] sm:$0xff]
    %v69 = vld [vmem:[%s49 + $0x8] sm:$0xff]
    %v70 = vld [vmem:[%s57] sm:$0xff]
    %v71 = vld [vmem:[%s57 + $0x8] sm:$0xff]
    %v72 = vld [vmem:[#allocation2] sm:$0xff]
    %73 = vxpose.xlu0.b32.start [1/16] %v68, 128
    %74 = vxpose.xlu0.b32.cont [2/16] %v69, 128
    %75 = vxpose.xlu0.b32.cont [3/16] 0.0, 128
    %76 = vxpose.xlu0.b32.cont [4/16] 0.0, 128
    %77 = vxpose.xlu0.b32.cont [5/16] 0.0, 128
    %78 = vxpose.xlu0.b32.cont [6/16] 0.0, 128
    %79 = vxpose.xlu0.b32.cont [7/16] 0.0, 128
    %80 = vxpose.xlu0.b32.cont [8/16] 0.0, 128
    %81 = vxpose.xlu0.b32.cont [9/16] 0.0, 128
    %82 = vxpose.xlu0.b32.cont [10/16] 0.0, 128
    %83 = vxpose.xlu0.b32.cont [11/16] 0.0, 128
    %84 = vxpose.xlu0.b32.cont [12/16] 0.0, 128
    %85 = vxpose.xlu0.b32.cont [13/16] 0.0, 128
    %86 = vxpose.xlu0.b32.cont [14/16] 0.0, 128
    %87 = vxpose.xlu0.b32.cont [15/16] 0.0, 128
    %88 = vxpose.xlu0.b32.end [16/16] 0.0, 128
    %v89 = vpop.trf.xlu0
    %v90 = vpop.trf.xlu0
    %v91 = vpop.trf.xlu0
    %v92 = vpop.trf.xlu0
    %v93 = vpop.trf.xlu0
    %v94 = vpop.trf.xlu0
    %v95 = vpop.trf.xlu0
    %v96 = vpop.trf.xlu0
    %v97 = vpop.trf.xlu0
    %v98 = vpop.trf.xlu0
    %v99 = vpop.trf.xlu0
    %v100 = vpop.trf.xlu0
    %v101 = vpop.trf.xlu0
    %v102 = vpop.trf.xlu0
    %v103 = vpop.trf.xlu0
    %v104 = vpop.trf.xlu0
    %vm105 = vcmask 130048
    %v107 = vsel %vm105, %v89, 0
    %109 = vmatprep.subr.mxu0 0.0
    %110 = vmatpush1.msra.mxu0 %v70
    %111 = vmatprep.subr.mxu0 0.0
    %112 = vmatpush1.msra.mxu0 %v71
    %113 = vmatprep.subr.mxu0 0.0
    %114 = vmatpush1.msra.mxu0 0.0
    %115 = vmatprep.subr.mxu0 0.0
    %116 = vmatpush1.msra.mxu0 0.0
    %117 = vmatprep.subr.mxu0 0.0
    %118 = vmatpush1.msra.mxu0 0.0
    %119 = vmatprep.subr.mxu0 0.0
    %120 = vmatpush1.msra.mxu0 0.0
    %121 = vmatprep.subr.mxu0 0.0
    %122 = vmatpush1.msra.mxu0 0.0
    %123 = vmatprep.subr.mxu0 0.0
    %124 = vmatpush1.msra.mxu0 0.0
    %125 = vmatprep.subr.mxu0 0.0
    %126 = vmatpush1.msra.mxu0 0.0
    %127 = vmatprep.subr.mxu0 0.0
    %128 = vmatpush1.msra.mxu0 0.0
    %129 = vmatprep.subr.mxu0 0.0
    %130 = vmatpush1.msra.mxu0 0.0
    %131 = vmatprep.subr.mxu0 0.0
    %132 = vmatpush1.msra.mxu0 0.0
    %133 = vmatprep.subr.mxu0 0.0
    %134 = vmatpush1.msra.mxu0 0.0
    %135 = vmatprep.subr.mxu0 0.0
    %136 = vmatpush1.msra.mxu0 0.0
    %137 = vmatprep.subr.mxu0 0.0
    %138 = vmatpush1.msra.mxu0 0.0
    %139 = vmatprep.subr.mxu0 0.0
    %140 = vmatpush1.msra.mxu0 0.0
    %141 = vmatprep.subr.mxu0 0.0
    %142 = vmatpush1.msra.mxu0 0.0
    %143 = vmatprep.subr.mxu0 0.0
    %144 = vmatpush1.msra.mxu0 0.0
    %145 = vmatprep.subr.mxu0 0.0
    %146 = vmatpush1.msra.mxu0 0.0
    %147 = vmatprep.subr.mxu0 0.0
    %148 = vmatpush1.msra.mxu0 0.0
    %149 = vmatprep.subr.mxu0 0.0
    %150 = vmatpush1.msra.mxu0 0.0
    %151 = vmatprep.subr.mxu0 0.0
    %152 = vmatpush1.msra.mxu0 0.0
    %153 = vmatprep.subr.mxu0 0.0
    %154 = vmatpush1.msra.mxu0 0.0
    %155 = vmatprep.subr.mxu0 0.0
    %156 = vmatpush1.msra.mxu0 0.0
    %157 = vmatprep.subr.mxu0 0.0
    %158 = vmatpush1.msra.mxu0 0.0
    %159 = vmatprep.subr.mxu0 0.0
    %160 = vmatpush1.msra.mxu0 0.0
    %161 = vmatprep.subr.mxu0 0.0
    %162 = vmatpush1.msra.mxu0 0.0
    %163 = vmatprep.subr.mxu0 0.0
    %164 = vmatpush1.msra.mxu0 0.0
    %165 = vmatprep.subr.mxu0 0.0
    %166 = vmatpush1.msra.mxu0 0.0
    %167 = vmatprep.subr.mxu0 0.0
    %168 = vmatpush1.msra.mxu0 0.0
    %169 = vmatprep.subr.mxu0 0.0
    %170 = vmatpush1.msra.mxu0 0.0
    %171 = vmatprep.subr.mxu0 0.0
    %172 = vmatpush1.msra.mxu0 0.0
    %173 = vmatprep.mubr.f32.mxu0 0.0
    %174 = vmatmul.mubr.f32.gmra.mrb[0].mxu0 %v107
    %v175 = vpop.f32.mrb[0].mxu0
    %v176 = vadd.f32 0.0, %v175
    %v177 = vpop.f32.mrb[0].mxu0
    %178 = vdwg.mxu0
    %v179 = vadd.f32 %v72, %v176
    %vm180 = vcmask 64512
    %181 = vst.msk [vmem:[#allocation2] sm:$0xff] %vm180, %v179
    %v182 = vld [vmem:[#allocation4] sm:$0xff]
    %v184 = vsel %vm105, 1.0, 0
    %186 = vmatprep.subr.mxu0 0.0
    %187 = vmatpush1.msra.mxu0 %v68
    %188 = vmatprep.subr.mxu0 0.0
    %189 = vmatpush1.msra.mxu0 %v69
    %190 = vmatprep.subr.mxu0 0.0
    %191 = vmatpush1.msra.mxu0 0.0
    %192 = vmatprep.subr.mxu0 0.0
    %193 = vmatpush1.msra.mxu0 0.0
    %194 = vmatprep.subr.mxu0 0.0
    %195 = vmatpush1.msra.mxu0 0.0
    %196 = vmatprep.subr.mxu0 0.0
    %197 = vmatpush1.msra.mxu0 0.0
    %198 = vmatprep.subr.mxu0 0.0
    %199 = vmatpush1.msra.mxu0 0.0
    %200 = vmatprep.subr.mxu0 0.0
    %201 = vmatpush1.msra.mxu0 0.0
    %202 = vmatprep.subr.mxu0 0.0
    %203 = vmatpush1.msra.mxu0 0.0
    %204 = vmatprep.subr.mxu0 0.0
    %205 = vmatpush1.msra.mxu0 0.0
    %206 = vmatprep.subr.mxu0 0.0
    %207 = vmatpush1.msra.mxu0 0.0
    %208 = vmatprep.subr.mxu0 0.0
    %209 = vmatpush1.msra.mxu0 0.0
    %210 = vmatprep.subr.mxu0 0.0
    %211 = vmatpush1.msra.mxu0 0.0
    %212 = vmatprep.subr.mxu0 0.0
    %213 = vmatpush1.msra.mxu0 0.0
    %214 = vmatprep.subr.mxu0 0.0
    %215 = vmatpush1.msra.mxu0 0.0
    %216 = vmatprep.subr.mxu0 0.0
    %217 = vmatpush1.msra.mxu0 0.0
    %218 = vmatprep.subr.mxu0 0.0
    %219 = vmatpush1.msra.mxu0 0.0
    %220 = vmatprep.subr.mxu0 0.0
    %221 = vmatpush1.msra.mxu0 0.0
    %222 = vmatprep.subr.mxu0 0.0
    %223 = vmatpush1.msra.mxu0 0.0
    %224 = vmatprep.subr.mxu0 0.0
    %225 = vmatpush1.msra.mxu0 0.0
    %226 = vmatprep.subr.mxu0 0.0
    %227 = vmatpush1.msra.mxu0 0.0
    %228 = vmatprep.subr.mxu0 0.0
    %229 = vmatpush1.msra.mxu0 0.0
    %230 = vmatprep.subr.mxu0 0.0
    %231 = vmatpush1.msra.mxu0 0.0
    %232 = vmatprep.subr.mxu0 0.0
    %233 = vmatpush1.msra.mxu0 0.0
    %234 = vmatprep.subr.mxu0 0.0
    %235 = vmatpush1.msra.mxu0 0.0
    %236 = vmatprep.subr.mxu0 0.0
    %237 = vmatpush1.msra.mxu0 0.0
    %238 = vmatprep.subr.mxu0 0.0
    %239 = vmatpush1.msra.mxu0 0.0
    %240 = vmatprep.subr.mxu0 0.0
    %241 = vmatpush1.msra.mxu0 0.0
    %242 = vmatprep.subr.mxu0 0.0
    %243 = vmatpush1.msra.mxu0 0.0
    %244 = vmatprep.subr.mxu0 0.0
    %245 = vmatpush1.msra.mxu0 0.0
    %246 = vmatprep.subr.mxu0 0.0
    %247 = vmatpush1.msra.mxu0 0.0
    %248 = vmatprep.subr.mxu0 0.0
    %249 = vmatpush1.msra.mxu0 0.0
    %250 = vmatprep.mubr.f32.mxu0 0.0
    %251 = vmatmul.mubr.f32.gmra.mrb[0].mxu0 %v184
    %v252 = vpop.f32.mrb[0].mxu0
    %v253 = vadd.f32 0.0, %v252
    %v254 = vpop.f32.mrb[0].mxu0
    %255 = vdwg.mxu0
    %v256 = vadd.f32 %v182, %v253
    %257 = vst.msk [vmem:[#allocation4] sm:$0xff] %vm180, %v256
    %v258 = vld [vmem:[#allocation6] sm:$0xff]
    %259 = vmatprep.subr.mxu0 0.0
    %260 = vmatpush1.msra.mxu0 %v70
    %261 = vmatprep.subr.mxu0 0.0
    %262 = vmatpush1.msra.mxu0 %v71
    %263 = vmatprep.subr.mxu0 0.0
    %264 = vmatpush1.msra.mxu0 0.0
    %265 = vmatprep.subr.mxu0 0.0
    %266 = vmatpush1.msra.mxu0 0.0
    %267 = vmatprep.subr.mxu0 0.0
    %268 = vmatpush1.msra.mxu0 0.0
    %269 = vmatprep.subr.mxu0 0.0
    %270 = vmatpush1.msra.mxu0 0.0
    %271 = vmatprep.subr.mxu0 0.0
    %272 = vmatpush1.msra.mxu0 0.0
    %273 = vmatprep.subr.mxu0 0.0
    %274 = vmatpush1.msra.mxu0 0.0
    %275 = vmatprep.subr.mxu0 0.0
    %276 = vmatpush1.msra.mxu0 0.0
    %277 = vmatprep.subr.mxu0 0.0
    %278 = vmatpush1.msra.mxu0 0.0
    %279 = vmatprep.subr.mxu0 0.0
    %280 = vmatpush1.msra.mxu0 0.0
    %281 = vmatprep.subr.mxu0 0.0
    %282 = vmatpush1.msra.mxu0 0.0
    %283 = vmatprep.subr.mxu0 0.0
    %284 = vmatpush1.msra.mxu0 0.0
    %285 = vmatprep.subr.mxu0 0.0
    %286 = vmatpush1.msra.mxu0 0.0
    %287 = vmatprep.subr.mxu0 0.0
    %288 = vmatpush1.msra.mxu0 0.0
    %289 = vmatprep.subr.mxu0 0.0
    %290 = vmatpush1.msra.mxu0 0.0
    %291 = vmatprep.subr.mxu0 0.0
    %292 = vmatpush1.msra.mxu0 0.0
    %293 = vmatprep.subr.mxu0 0.0
    %294 = vmatpush1.msra.mxu0 0.0
    %295 = vmatprep.subr.mxu0 0.0
    %296 = vmatpush1.msra.mxu0 0.0
    %297 = vmatprep.subr.mxu0 0.0
    %298 = vmatpush1.msra.mxu0 0.0
    %299 = vmatprep.subr.mxu0 0.0
    %300 = vmatpush1.msra.mxu0 0.0
    %301 = vmatprep.subr.mxu0 0.0
    %302 = vmatpush1.msra.mxu0 0.0
    %303 = vmatprep.subr.mxu0 0.0
    %304 = vmatpush1.msra.mxu0 0.0
    %305 = vmatprep.subr.mxu0 0.0
    %306 = vmatpush1.msra.mxu0 0.0
    %307 = vmatprep.subr.mxu0 0.0
    %308 = vmatpush1.msra.mxu0 0.0
    %309 = vmatprep.subr.mxu0 0.0
    %310 = vmatpush1.msra.mxu0 0.0
    %311 = vmatprep.subr.mxu0 0.0
    %312 = vmatpush1.msra.mxu0 0.0
    %313 = vmatprep.subr.mxu0 0.0
    %314 = vmatpush1.msra.mxu0 0.0
    %315 = vmatprep.subr.mxu0 0.0
    %316 = vmatpush1.msra.mxu0 0.0
    %317 = vmatprep.subr.mxu0 0.0
    %318 = vmatpush1.msra.mxu0 0.0
    %319 = vmatprep.subr.mxu0 0.0
    %320 = vmatpush1.msra.mxu0 0.0
    %321 = vmatprep.subr.mxu0 0.0
    %322 = vmatpush1.msra.mxu0 0.0
    %323 = vmatprep.mubr.f32.mxu0 0.0
    %324 = vmatmul.mubr.f32.gmra.mrb[0].mxu0 %v184
    %v325 = vpop.f32.mrb[0].mxu0
    %v326 = vadd.f32 0.0, %v325
    %v327 = vpop.f32.mrb[0].mxu0
    %328 = vdwg.mxu0
    %v329 = vadd.f32 %v258, %v326
    %330 = vst.msk [vmem:[#allocation6] sm:$0xff] %vm180, %v329
    // Predicated region
    $region14: #{tpu_custom_call.1} parent=1 // pred_check
      _
    $region15: #{tpu_custom_call.1} parent=1 // pred_check_branch
      %332 = sbr.rel (0) target = $region17
    $region16: #{tpu_custom_call.1} parent=1 // pred_region
      %s334 = ssub.s32 128, 128
      %335 = vsyncadd [#allocation3], %s334
      %s337 = sshll.u32 [#allocation2], 4
      %s338 = int_to_ptr.vmem [resolvable:$true] %s337
      %340 = dma.vmem_to_hbm [thread:$0]  %s338, 128, %s2, [#allocation3]
    $region17: #{tpu_custom_call.1} parent=1 // pred_fallthru
      _
    // Predicated region
    $region18: #{tpu_custom_call.1} parent=1 // pred_check
      _
    $region19: #{tpu_custom_call.1} parent=1 // pred_check_branch
      %342 = sbr.rel (0) target = $region21
    $region20: #{tpu_custom_call.1} parent=1 // pred_region
      %s344 = ssub.s32 128, 128
      %345 = vsyncadd [#allocation5], %s344
      %s347 = sshll.u32 [#allocation4], 4
      %s348 = int_to_ptr.vmem [resolvable:$true] %s347
      %350 = dma.vmem_to_hbm [thread:$0]  %s348, 128, %s3, [#allocation5]
    $region21: #{tpu_custom_call.1} parent=1 // pred_fallthru
      _
    // Predicated region
    $region22: #{tpu_custom_call.1} parent=1 // pred_check
      _
    $region23: #{tpu_custom_call.1} parent=1 // pred_check_branch
      %352 = sbr.rel (0) target = $region25
    $region24: #{tpu_custom_call.1} parent=1 // pred_region
      %s354 = ssub.s32 128, 128
      %355 = vsyncadd [#allocation5], %s354
      %s357 = sshll.u32 [#allocation6], 4
      %s358 = int_to_ptr.vmem [resolvable:$true] %s357
      %360 = dma.vmem_to_hbm [thread:$0]  %s358, 128, %s4, [#allocation5]
    $region25: #{tpu_custom_call.1} parent=1 // pred_fallthru
      _
    // Predicated region
    $region26: #{tpu_custom_call.1} parent=1 // pred_check
      _
    $region27: #{tpu_custom_call.1} parent=1 // pred_check_branch
      %362 = sbr.rel (0) target = $region29
    $region28: #{tpu_custom_call.1} parent=1 // pred_region
      %363 = dma.done [#allocation3], 128
    $region29: #{tpu_custom_call.1} parent=1 // pred_fallthru
      _
    // Predicated region
    $region30: #{tpu_custom_call.1} parent=1 // pred_check
      _
    $region31: #{tpu_custom_call.1} parent=1 // pred_check_branch
      %365 = sbr.rel (0) target = $region33
    $region32: #{tpu_custom_call.1} parent=1 // pred_region
      %366 = dma.done [#allocation5], 128
    $region33: #{tpu_custom_call.1} parent=1 // pred_fallthru
      _
    // Predicated region
    $region34: #{tpu_custom_call.1} parent=1 // pred_check
      _
    $region35: #{tpu_custom_call.1} parent=1 // pred_check_branch
      %368 = sbr.rel (0) target = $region37
    $region36: #{tpu_custom_call.1} parent=1 // pred_region
      %369 = dma.done [#allocation5], 128
    $region37: #{tpu_custom_call.1} parent=1 // pred_fallthru
      _
    %370 = vsyncpa [#allocation3], 1
    %371 = vsyncpa [#allocation5], 1

</llo_original>
